<compile_context>
chip_gen: v5e
topology: v5e:2x2
jax: 0.10.0
libtpu: 0.0.40
codegen_flags: <defaults>
</compile_context>

<pallas_src>
import math
import numpy as np
import jax
import jax.numpy as jnp
from jax.experimental import pallas as pl
from jax.experimental.pallas import tpu as pltpu  # noqa: F401 (TPU backend)

# ----- small config (consistent with the module) -----
B = 2              # batch
T = 8              # sequence length
C = 64             # n_embd
N_HEAD = 4
N_KV = 2           # n_kv_head
HD = C // N_HEAD   # head dim = 16
HHD = HD // 2      # 8
N_REP = N_HEAD // N_KV
MULTIPLE_OF = 32
H_MLP = MULTIPLE_OF * ((int(2 * (4 * C) / 3) + MULTIPLE_OF - 1) // MULTIPLE_OF)  # 192
H_PAD = 256        # H_MLP zero-padded to a multiple of 128
QKV_OUT = (N_HEAD + 2 * N_KV) * HD   # 128
BT = B * T         # 16
NQ = N_HEAD * HHD  # 32 (q even / odd slab width)
NK = N_KV * HHD    # 16 (k even / odd slab width)
EPS = 1e-6
ROPE_THETA = 10000.0
NEG_BIAS = -1e30


def block_kernel(x_ref, wa_ref, wb_ref, aux_ref, o_ref):
    x = x_ref[...]                               # (BT, C) f32

    # static slices of the packed operands
    wqkv = wa_ref[:, :QKV_OUT]                   # (C, 128)  g1 & 1/sqrt(hd) folded
    wfc12 = wa_ref[:, QKV_OUT:]                  # (C, 512)  g2 folded
    wproj = wb_ref[:C, :]                        # (C, C)
    wcp = wb_ref[C:, :]                          # (H_PAD, C)
    cos_q = aux_ref[:, :NQ]                      # (BT, 32)
    sin_q = aux_ref[:, NQ:2 * NQ]                # (BT, 32)
    bias = aux_ref[:, 2 * NQ:2 * NQ + BT]        # (BT, BT) additive causal/block mask
    cos_k = cos_q[:, :NK]                        # (BT, 16) (same per-head tables)
    sin_k = sin_q[:, :NK]

    def rmsnorm(v):                              # gain folded into the weights
        ms = jnp.mean(v * v, axis=-1, keepdims=True)
        return v * jax.lax.rsqrt(ms + EPS)

    # ---- attention branch ----
    h1 = rmsnorm(x)
    qkv = jnp.dot(h1, wqkv, preferred_element_type=jnp.float32)       # (BT, 128)

    qe = qkv[:, :NQ]                             # q even components, head-major
    qo = qkv[:, NQ:2 * NQ]                       # q odd components
    ke = qkv[:, 2 * NQ:2 * NQ + NK]              # k even (kv heads)
    ko = qkv[:, 2 * NQ + NK:2 * NQ + 2 * NK]     # k odd
    v = qkv[:, 2 * NQ + 2 * NK:]                 # (BT, N_KV*HD), original layout

    # RoPE on whole slabs (attention scale already folded into q columns)
    qe_r = qe * cos_q - qo * sin_q
    qo_r = qe * sin_q + qo * cos_q
    ke_r = ke * cos_k - ko * sin_k
    ko_r = ke * sin_k + ko * cos_k

    # one lane-concat each -> per-head [even|odd]-adjacent layout, so the
    # score phase is a single K=16 dot per head (XLU concat, MXU dot)
    q_hd = jnp.concatenate(
        [p for h in range(N_HEAD)
         for p in (qe_r[:, h * HHD:(h + 1) * HHD], qo_r[:, h * HHD:(h + 1) * HHD])],
        axis=-1)                                 # (BT, N_HEAD*HD)
    k_hd = jnp.concatenate(
        [p for h in range(N_KV)
         for p in (ke_r[:, h * HHD:(h + 1) * HHD], ko_r[:, h * HHD:(h + 1) * HHD])],
        axis=-1)                                 # (BT, N_KV*HD)

    ys = []
    for h in range(N_HEAD):                      # static unroll over heads
        kvh = h // N_REP                         # repeat_kv
        q_h = q_hd[:, h * HD:(h + 1) * HD]
        k_h = k_hd[:, kvh * HD:(kvh + 1) * HD]
        s = jax.lax.dot_general(q_h, k_h, (((1,), (1,)), ((), ())),
                                preferred_element_type=jnp.float32) + bias
        m = jnp.max(s, axis=-1, keepdims=True)
        p = jnp.exp(s - m)
        att = p * pl.reciprocal(jnp.sum(p, axis=-1, keepdims=True), approx=True)
        v_h = v[:, kvh * HD:(kvh + 1) * HD]
        ys.append(jnp.dot(att, v_h, preferred_element_type=jnp.float32))   # (BT, HD)

    y = jnp.concatenate(ys, axis=-1)                                       # (BT, C)
    x2 = x + jnp.dot(y, wproj, preferred_element_type=jnp.float32)

    # ---- MLP branch (SwiGLU), fused fc/fc2 matmul ----
    h2 = rmsnorm(x2)
    a = jnp.dot(h2, wfc12, preferred_element_type=jnp.float32)             # (BT, 2*H_PAD)
    a1 = a[:, :H_PAD]
    a2 = a[:, H_PAD:]
    mlp = a1 * (a2 * jax.nn.sigmoid(a2))                                   # x1 * silu(x2)
    o_ref[...] = x2 + jnp.dot(mlp, wcp, preferred_element_type=jnp.float32)


def block_forward(x, w_a, w_b, aux):
    Bb, Tt, Cc = x.shape
    x2d = x.reshape(Bb * Tt, Cc)
    flops = 2 * BT * (C * QKV_OUT + C * C + C * 2 * H_PAD + H_PAD * C) \
        + N_HEAD * 2 * (2 * BT * BT * HD)
    transcendentals = BT * BT * N_HEAD + BT * N_HEAD + BT * H_PAD + 2 * BT
    bytes_accessed = 4 * (2 * BT * C + C * (QKV_OUT + 2 * H_PAD)
                          + (C + H_PAD) * C + BT * (2 * NQ + BT))
    out = pl.pallas_call(
        block_kernel,
        out_shape=jax.ShapeDtypeStruct((Bb * Tt, Cc), x.dtype),
        cost_estimate=pl.CostEstimate(flops=flops,
                                      transcendentals=transcendentals,
                                      bytes_accessed=bytes_accessed),
    )(x2d, w_a, w_b, aux)
    return out.reshape(Bb, Tt, Cc)


# ---------------- pure-JAX reference (mirrors the PyTorch forward) ----------------
def reference_block(x, W_attn, W_proj, W_fc, W_fc2, W_cp, g1, g2, cos, sin):
    def rmsnorm(v, g):
        return v * jax.lax.rsqrt(jnp.mean(v * v, -1, keepdims=True) + EPS) * g

    Bb, Tt, Cc = x.shape
    h1 = rmsnorm(x, g1[0])
    qkv = h1 @ W_attn.T
    q = qkv[..., :N_HEAD * HD].reshape(Bb, Tt, N_HEAD, HD)
    k = qkv[..., N_HEAD * HD:(N_HEAD + N_KV) * HD].reshape(Bb, Tt, N_KV, HD)
    v = qkv[..., (N_HEAD + N_KV) * HD:].reshape(Bb, Tt, N_KV, HD)

    def rope(t):  # interleaved, like torch.view_as_complex
        tr = t.reshape(*t.shape[:-1], HD // 2, 2)
        a, b = tr[..., 0], tr[..., 1]
        c = cos[None, :, None, :]
        s = sin[None, :, None, :]
        return jnp.stack([a * c - b * s, a * s + b * c], axis=-1).reshape(t.shape)

    q, k = rope(q), rope(k)
    k = jnp.repeat(k, N_REP, axis=2)
    v = jnp.repeat(v, N_REP, axis=2)
    q, k, v = (jnp.transpose(t, (0, 2, 1, 3)) for t in (q, k, v))
    scores = (q @ jnp.swapaxes(k, -1, -2)) * (1.0 / math.sqrt(HD))
    mask = jnp.triu(jnp.ones((Tt, Tt), bool), 1)
    scores = jnp.where(mask, jnp.finfo(jnp.float32).min, scores)
    att = jax.nn.softmax(scores, axis=-1)
    y = att @ v
    y = jnp.transpose(y, (0, 2, 1, 3)).reshape(Bb, Tt, Cc)
    x = x + y @ W_proj.T
    h2 = rmsnorm(x, g2[0])
    m = (h2 @ W_fc.T) * jax.nn.silu(h2 @ W_fc2.T)
    return x + m @ W_cp.T


if __name__ == "__main__":
    key = jax.random.PRNGKey(0)
    ks = jax.random.split(key, 9)

    x = jax.random.normal(ks[0], (B, T, C), dtype=jnp.float32)
    # PyTorch-layout weights (out_features, in_features), deterministic init
    W_attn = 0.06 * jax.random.normal(ks[1], (QKV_OUT, C), dtype=jnp.float32)
    W_proj = 0.06 * jax.random.normal(ks[2], (C, C), dtype=jnp.float32)
    W_fc = 0.06 * jax.random.normal(ks[3], (H_MLP, C), dtype=jnp.float32)
    W_fc2 = 0.06 * jax.random.normal(ks[4], (H_MLP, C), dtype=jnp.float32)
    W_cp = 0.06 * jax.random.normal(ks[5], (C, H_MLP), dtype=jnp.float32)
    g1 = 1.0 + 0.05 * jax.random.normal(ks[6], (1, C), dtype=jnp.float32)
    g2 = 1.0 + 0.05 * jax.random.normal(ks[7], (1, C), dtype=jnp.float32)

    # RoPE tables (freqs_cis equivalent): (T, HD//2) cos / sin
    freqs = 1.0 / (ROPE_THETA ** (np.arange(0, HD, 2, dtype=np.float32) / HD))
    angles = np.outer(np.arange(T, dtype=np.float32), freqs)     # (T, HHD)
    cos_np, sin_np = np.cos(angles), np.sin(angles)

    # --- kernel-side weight prep (one-time, host glue) ---
    g1v = np.asarray(g1, dtype=np.float64)[0]
    g2v = np.asarray(g2, dtype=np.float64)[0]
    scale = 1.0 / math.sqrt(HD)

    # QKV column permutation -> [q evens | q odds | k evens | k odds | v],
    # with g1 folded into rows and the attention scale folded into q columns.
    evens = np.arange(0, HD, 2)
    odds = np.arange(1, HD, 2)
    q_even = np.concatenate([h * HD + evens for h in range(N_HEAD)])
    q_odd = np.concatenate([h * HD + odds for h in range(N_HEAD)])
    k_even = N_HEAD * HD + np.concatenate([h * HD + evens for h in range(N_KV)])
    k_odd = N_HEAD * HD + np.concatenate([h * HD + odds for h in range(N_KV)])
    v_cols = np.arange((N_HEAD + N_KV) * HD, QKV_OUT)
    col_perm = np.concatenate([q_even, q_odd, k_even, k_odd, v_cols])

    wqkv_t = (np.asarray(W_attn, dtype=np.float64).T * g1v[:, None])[:, col_perm]
    wqkv_t[:, :2 * NQ] *= scale                              # fold 1/sqrt(hd) into q
    # fused (128-aligned zero-padded) fc / fc2 with g2 folded into rows
    wfc12 = np.zeros((C, 2 * H_PAD), np.float64)
    wfc12[:, :H_MLP] = np.asarray(W_fc, dtype=np.float64).T * g2v[:, None]
    wfc12[:, H_PAD:H_PAD + H_MLP] = np.asarray(W_fc2, dtype=np.float64).T * g2v[:, None]
    w_a = jnp.asarray(np.concatenate([wqkv_t, wfc12], axis=1), dtype=jnp.float32)  # (64, 640)

    wproj_t = np.asarray(W_proj, dtype=np.float64).T
    wcp_pad = np.zeros((H_PAD, C), np.float64)
    wcp_pad[:H_MLP, :] = np.asarray(W_cp, dtype=np.float64).T
    w_b = jnp.asarray(np.concatenate([wproj_t, wcp_pad], axis=0), dtype=jnp.float32)  # (320, 64)

    # aux = [cos (16,32) | sin (16,32) | additive causal/block-diag bias (16,16)]
    cos_t = np.tile(cos_np, (B, N_HEAD))
    sin_t = np.tile(sin_np, (B, N_HEAD))
    r = np.arange(BT)[:, None]
    c = np.arange(BT)[None, :]
    allowed = (r // T == c // T) & (c <= r)
    bias_np = np.where(allowed, 0.0, NEG_BIAS)
    aux = jnp.asarray(np.concatenate([cos_t, sin_t, bias_np], axis=1),
                      dtype=jnp.float32)                                   # (16, 80)

    out = block_forward(x, w_a, w_b, aux)
    out = jax.block_until_ready(out)

    cos_r = jnp.asarray(cos_np, dtype=jnp.float32)
    sin_r = jnp.asarray(sin_np, dtype=jnp.float32)
    ref = reference_block(x, W_attn, W_proj, W_fc, W_fc2, W_cp, g1, g2, cos_r, sin_r)
    ref = jax.block_until_ready(ref)

    np.testing.assert_allclose(np.asarray(out), np.asarray(ref), rtol=2e-2, atol=2e-2)
    print("KERNEL_OK")
</pallas_src>

<mosaic_0001>
module attributes {stable_mosaic.version = 11 : i64} {
  func.func @block_kernel(%arg0: memref<16x64xf32, #tpu.memory_space<vmem>>, %arg1: memref<64x640xf32, #tpu.memory_space<vmem>>, %arg2: memref<320x64xf32, #tpu.memory_space<vmem>>, %arg3: memref<16x80xf32, #tpu.memory_space<vmem>>, %arg4: memref<16x64xf32, #tpu.memory_space<vmem>>) attributes {dimension_semantics = [], scalar_prefetch = 0 : i64, scratch_operands = 0 : i64, tpu.core_type = #tpu.core_type<tc>} {
    %c0 = arith.constant 0 : index
    %c0_0 = arith.constant 0 : index
    %0 = vector.load %arg0[%c0, %c0_0] : memref<16x64xf32, #tpu.memory_space<vmem>>, vector<16x64xf32>
    %c0_1 = arith.constant 0 : index
    %c0_2 = arith.constant 0 : index
    %1 = vector.load %arg1[%c0_1, %c0_2] : memref<64x640xf32, #tpu.memory_space<vmem>>, vector<64x128xf32>
    %c0_3 = arith.constant 0 : index
    %c128 = arith.constant 128 : index
    %2 = vector.load %arg1[%c0_3, %c128] : memref<64x640xf32, #tpu.memory_space<vmem>>, vector<64x512xf32>
    %c0_4 = arith.constant 0 : index
    %c0_5 = arith.constant 0 : index
    %3 = vector.load %arg2[%c0_4, %c0_5] : memref<320x64xf32, #tpu.memory_space<vmem>>, vector<64x64xf32>
    %c64 = arith.constant 64 : index
    %c0_6 = arith.constant 0 : index
    %4 = vector.load %arg2[%c64, %c0_6] : memref<320x64xf32, #tpu.memory_space<vmem>>, vector<256x64xf32>
    %c0_7 = arith.constant 0 : index
    %c0_8 = arith.constant 0 : index
    %5 = vector.load %arg3[%c0_7, %c0_8] : memref<16x80xf32, #tpu.memory_space<vmem>>, vector<16x32xf32>
    %c0_9 = arith.constant 0 : index
    %c32 = arith.constant 32 : index
    %6 = vector.load %arg3[%c0_9, %c32] : memref<16x80xf32, #tpu.memory_space<vmem>>, vector<16x32xf32>
    %c0_10 = arith.constant 0 : index
    %c64_11 = arith.constant 64 : index
    %7 = vector.load %arg3[%c0_10, %c64_11] : memref<16x80xf32, #tpu.memory_space<vmem>>, vector<16x16xf32>
    %8 = vector.extract_strided_slice %5 {offsets = [0, 0], sizes = [16, 16], strides = [1, 1]} : vector<16x32xf32> to vector<16x16xf32>
    %9 = vector.extract_strided_slice %6 {offsets = [0, 0], sizes = [16, 16], strides = [1, 1]} : vector<16x32xf32> to vector<16x16xf32>
    %10 = arith.mulf %0, %0 : vector<16x64xf32>
    %cst = arith.constant dense<0.000000e+00> : vector<16xf32>
    %11 = vector.multi_reduction <add>, %10, %cst [1] : vector<16x64xf32> to vector<16xf32>
    %12 = vector.shape_cast %11 : vector<16xf32> to vector<16x1xf32>
    %cst_12 = arith.constant 6.400000e+01 : f32
    %13 = vector.broadcast %cst_12 : f32 to vector<16x1xf32>
    %14 = arith.divf %12, %13 : vector<16x1xf32>
    %cst_13 = arith.constant 9.99999997E-7 : f32
    %15 = vector.broadcast %cst_13 : f32 to vector<16x1xf32>
    %16 = arith.addf %14, %15 : vector<16x1xf32>
    %17 = math.rsqrt %16 : vector<16x1xf32>
    %18 = vector.broadcast %17 : vector<16x1xf32> to vector<16x64xf32>
    %19 = arith.mulf %0, %18 : vector<16x64xf32>
    %cst_14 = arith.constant dense<0.000000e+00> : vector<16x128xf32>
    %20 = tpu.matmul %19, %1, %cst_14 {dimension_numbers = #tpu.dot_dimension_numbers<[1], [0], [0], [1], [0, 0, 1, 1], [], []>} : vector<16x64xf32>, vector<64x128xf32>, vector<16x128xf32> -> vector<16x128xf32>
    %21 = vector.extract_strided_slice %20 {offsets = [0, 0], sizes = [16, 32], strides = [1, 1]} : vector<16x128xf32> to vector<16x32xf32>
    %22 = vector.extract_strided_slice %20 {offsets = [0, 32], sizes = [16, 32], strides = [1, 1]} : vector<16x128xf32> to vector<16x32xf32>
    %23 = vector.extract_strided_slice %20 {offsets = [0, 64], sizes = [16, 16], strides = [1, 1]} : vector<16x128xf32> to vector<16x16xf32>
    %24 = vector.extract_strided_slice %20 {offsets = [0, 80], sizes = [16, 16], strides = [1, 1]} : vector<16x128xf32> to vector<16x16xf32>
    %25 = vector.extract_strided_slice %20 {offsets = [0, 96], sizes = [16, 32], strides = [1, 1]} : vector<16x128xf32> to vector<16x32xf32>
    %26 = arith.mulf %21, %5 : vector<16x32xf32>
    %27 = arith.mulf %22, %6 : vector<16x32xf32>
    %28 = arith.subf %26, %27 : vector<16x32xf32>
    %29 = arith.mulf %21, %6 : vector<16x32xf32>
    %30 = arith.mulf %22, %5 : vector<16x32xf32>
    %31 = arith.addf %29, %30 : vector<16x32xf32>
    %32 = arith.mulf %23, %8 : vector<16x16xf32>
    %33 = arith.mulf %24, %9 : vector<16x16xf32>
    %34 = arith.subf %32, %33 : vector<16x16xf32>
    %35 = arith.mulf %23, %9 : vector<16x16xf32>
    %36 = arith.mulf %24, %8 : vector<16x16xf32>
    %37 = arith.addf %35, %36 : vector<16x16xf32>
    %38 = vector.extract_strided_slice %28 {offsets = [0, 0], sizes = [16, 8], strides = [1, 1]} : vector<16x32xf32> to vector<16x8xf32>
    %39 = vector.extract_strided_slice %31 {offsets = [0, 0], sizes = [16, 8], strides = [1, 1]} : vector<16x32xf32> to vector<16x8xf32>
    %40 = vector.extract_strided_slice %28 {offsets = [0, 8], sizes = [16, 8], strides = [1, 1]} : vector<16x32xf32> to vector<16x8xf32>
    %41 = vector.extract_strided_slice %31 {offsets = [0, 8], sizes = [16, 8], strides = [1, 1]} : vector<16x32xf32> to vector<16x8xf32>
    %42 = vector.extract_strided_slice %28 {offsets = [0, 16], sizes = [16, 8], strides = [1, 1]} : vector<16x32xf32> to vector<16x8xf32>
    %43 = vector.extract_strided_slice %31 {offsets = [0, 16], sizes = [16, 8], strides = [1, 1]} : vector<16x32xf32> to vector<16x8xf32>
    %44 = vector.extract_strided_slice %28 {offsets = [0, 24], sizes = [16, 8], strides = [1, 1]} : vector<16x32xf32> to vector<16x8xf32>
    %45 = vector.extract_strided_slice %31 {offsets = [0, 24], sizes = [16, 8], strides = [1, 1]} : vector<16x32xf32> to vector<16x8xf32>
    %46 = tpu.concatenate %38, %39, %40, %41, %42, %43, %44, %45 in 1 : vector<16x8xf32>, vector<16x8xf32>, vector<16x8xf32>, vector<16x8xf32>, vector<16x8xf32>, vector<16x8xf32>, vector<16x8xf32>, vector<16x8xf32> -> vector<16x64xf32>
    %47 = vector.extract_strided_slice %34 {offsets = [0, 0], sizes = [16, 8], strides = [1, 1]} : vector<16x16xf32> to vector<16x8xf32>
    %48 = vector.extract_strided_slice %37 {offsets = [0, 0], sizes = [16, 8], strides = [1, 1]} : vector<16x16xf32> to vector<16x8xf32>
    %49 = vector.extract_strided_slice %34 {offsets = [0, 8], sizes = [16, 8], strides = [1, 1]} : vector<16x16xf32> to vector<16x8xf32>
    %50 = vector.extract_strided_slice %37 {offsets = [0, 8], sizes = [16, 8], strides = [1, 1]} : vector<16x16xf32> to vector<16x8xf32>
    %51 = tpu.concatenate %47, %48, %49, %50 in 1 : vector<16x8xf32>, vector<16x8xf32>, vector<16x8xf32>, vector<16x8xf32> -> vector<16x32xf32>
    %52 = vector.extract_strided_slice %46 {offsets = [0, 0], sizes = [16, 16], strides = [1, 1]} : vector<16x64xf32> to vector<16x16xf32>
    %53 = vector.extract_strided_slice %51 {offsets = [0, 0], sizes = [16, 16], strides = [1, 1]} : vector<16x32xf32> to vector<16x16xf32>
    %cst_15 = arith.constant dense<0.000000e+00> : vector<16x16xf32>
    %54 = tpu.matmul %52, %53, %cst_15 {dimension_numbers = #tpu.dot_dimension_numbers<[1], [1], [0], [0], [0, 0, 1, 0], [], []>} : vector<16x16xf32>, vector<16x16xf32>, vector<16x16xf32> -> vector<16x16xf32>
    %55 = arith.addf %54, %7 : vector<16x16xf32>
    %cst_16 = arith.constant dense<0xFF800000> : vector<16xf32>
    %56 = vector.multi_reduction <maximumf>, %55, %cst_16 [1] : vector<16x16xf32> to vector<16xf32>
    %57 = vector.shape_cast %56 : vector<16xf32> to vector<16x1xf32>
    %58 = vector.broadcast %57 : vector<16x1xf32> to vector<16x16xf32>
    %59 = arith.subf %55, %58 : vector<16x16xf32>
    %60 = math.exp %59 : vector<16x16xf32>
    %cst_17 = arith.constant dense<0.000000e+00> : vector<16xf32>
    %61 = vector.multi_reduction <add>, %60, %cst_17 [1] : vector<16x16xf32> to vector<16xf32>
    %62 = vector.shape_cast %61 : vector<16xf32> to vector<16x1xf32>
    %63 = tpu.reciprocal %62 {approx = true} : vector<16x1xf32> -> vector<16x1xf32>
    %64 = vector.broadcast %63 : vector<16x1xf32> to vector<16x16xf32>
    %65 = arith.mulf %60, %64 : vector<16x16xf32>
    %66 = vector.extract_strided_slice %25 {offsets = [0, 0], sizes = [16, 16], strides = [1, 1]} : vector<16x32xf32> to vector<16x16xf32>
    %cst_18 = arith.constant dense<0.000000e+00> : vector<16x16xf32>
    %67 = tpu.matmul %65, %66, %cst_18 {dimension_numbers = #tpu.dot_dimension_numbers<[1], [0], [0], [1], [0, 0, 1, 1], [], []>} : vector<16x16xf32>, vector<16x16xf32>, vector<16x16xf32> -> vector<16x16xf32>
    %68 = vector.extract_strided_slice %46 {offsets = [0, 16], sizes = [16, 16], strides = [1, 1]} : vector<16x64xf32> to vector<16x16xf32>
    %69 = vector.extract_strided_slice %51 {offsets = [0, 0], sizes = [16, 16], strides = [1, 1]} : vector<16x32xf32> to vector<16x16xf32>
    %cst_19 = arith.constant dense<0.000000e+00> : vector<16x16xf32>
    %70 = tpu.matmul %68, %69, %cst_19 {dimension_numbers = #tpu.dot_dimension_numbers<[1], [1], [0], [0], [0, 0, 1, 0], [], []>} : vector<16x16xf32>, vector<16x16xf32>, vector<16x16xf32> -> vector<16x16xf32>
    %71 = arith.addf %70, %7 : vector<16x16xf32>
    %cst_20 = arith.constant dense<0xFF800000> : vector<16xf32>
    %72 = vector.multi_reduction <maximumf>, %71, %cst_20 [1] : vector<16x16xf32> to vector<16xf32>
    %73 = vector.shape_cast %72 : vector<16xf32> to vector<16x1xf32>
    %74 = vector.broadcast %73 : vector<16x1xf32> to vector<16x16xf32>
    %75 = arith.subf %71, %74 : vector<16x16xf32>
    %76 = math.exp %75 : vector<16x16xf32>
    %cst_21 = arith.constant dense<0.000000e+00> : vector<16xf32>
    %77 = vector.multi_reduction <add>, %76, %cst_21 [1] : vector<16x16xf32> to vector<16xf32>
    %78 = vector.shape_cast %77 : vector<16xf32> to vector<16x1xf32>
    %79 = tpu.reciprocal %78 {approx = true} : vector<16x1xf32> -> vector<16x1xf32>
    %80 = vector.broadcast %79 : vector<16x1xf32> to vector<16x16xf32>
    %81 = arith.mulf %76, %80 : vector<16x16xf32>
    %82 = vector.extract_strided_slice %25 {offsets = [0, 0], sizes = [16, 16], strides = [1, 1]} : vector<16x32xf32> to vector<16x16xf32>
    %cst_22 = arith.constant dense<0.000000e+00> : vector<16x16xf32>
    %83 = tpu.matmul %81, %82, %cst_22 {dimension_numbers = #tpu.dot_dimension_numbers<[1], [0], [0], [1], [0, 0, 1, 1], [], []>} : vector<16x16xf32>, vector<16x16xf32>, vector<16x16xf32> -> vector<16x16xf32>
    %84 = vector.extract_strided_slice %46 {offsets = [0, 32], sizes = [16, 16], strides = [1, 1]} : vector<16x64xf32> to vector<16x16xf32>
    %85 = vector.extract_strided_slice %51 {offsets = [0, 16], sizes = [16, 16], strides = [1, 1]} : vector<16x32xf32> to vector<16x16xf32>
    %cst_23 = arith.constant dense<0.000000e+00> : vector<16x16xf32>
    %86 = tpu.matmul %84, %85, %cst_23 {dimension_numbers = #tpu.dot_dimension_numbers<[1], [1], [0], [0], [0, 0, 1, 0], [], []>} : vector<16x16xf32>, vector<16x16xf32>, vector<16x16xf32> -> vector<16x16xf32>
    %87 = arith.addf %86, %7 : vector<16x16xf32>
    %cst_24 = arith.constant dense<0xFF800000> : vector<16xf32>
    %88 = vector.multi_reduction <maximumf>, %87, %cst_24 [1] : vector<16x16xf32> to vector<16xf32>
    %89 = vector.shape_cast %88 : vector<16xf32> to vector<16x1xf32>
    %90 = vector.broadcast %89 : vector<16x1xf32> to vector<16x16xf32>
    %91 = arith.subf %87, %90 : vector<16x16xf32>
    %92 = math.exp %91 : vector<16x16xf32>
    %cst_25 = arith.constant dense<0.000000e+00> : vector<16xf32>
    %93 = vector.multi_reduction <add>, %92, %cst_25 [1] : vector<16x16xf32> to vector<16xf32>
    %94 = vector.shape_cast %93 : vector<16xf32> to vector<16x1xf32>
    %95 = tpu.reciprocal %94 {approx = true} : vector<16x1xf32> -> vector<16x1xf32>
    %96 = vector.broadcast %95 : vector<16x1xf32> to vector<16x16xf32>
    %97 = arith.mulf %92, %96 : vector<16x16xf32>
    %98 = vector.extract_strided_slice %25 {offsets = [0, 16], sizes = [16, 16], strides = [1, 1]} : vector<16x32xf32> to vector<16x16xf32>
    %cst_26 = arith.constant dense<0.000000e+00> : vector<16x16xf32>
    %99 = tpu.matmul %97, %98, %cst_26 {dimension_numbers = #tpu.dot_dimension_numbers<[1], [0], [0], [1], [0, 0, 1, 1], [], []>} : vector<16x16xf32>, vector<16x16xf32>, vector<16x16xf32> -> vector<16x16xf32>
    %100 = vector.extract_strided_slice %46 {offsets = [0, 48], sizes = [16, 16], strides = [1, 1]} : vector<16x64xf32> to vector<16x16xf32>
    %101 = vector.extract_strided_slice %51 {offsets = [0, 16], sizes = [16, 16], strides = [1, 1]} : vector<16x32xf32> to vector<16x16xf32>
    %cst_27 = arith.constant dense<0.000000e+00> : vector<16x16xf32>
    %102 = tpu.matmul %100, %101, %cst_27 {dimension_numbers = #tpu.dot_dimension_numbers<[1], [1], [0], [0], [0, 0, 1, 0], [], []>} : vector<16x16xf32>, vector<16x16xf32>, vector<16x16xf32> -> vector<16x16xf32>
    %103 = arith.addf %102, %7 : vector<16x16xf32>
    %cst_28 = arith.constant dense<0xFF800000> : vector<16xf32>
    %104 = vector.multi_reduction <maximumf>, %103, %cst_28 [1] : vector<16x16xf32> to vector<16xf32>
    %105 = vector.shape_cast %104 : vector<16xf32> to vector<16x1xf32>
    %106 = vector.broadcast %105 : vector<16x1xf32> to vector<16x16xf32>
    %107 = arith.subf %103, %106 : vector<16x16xf32>
    %108 = math.exp %107 : vector<16x16xf32>
    %cst_29 = arith.constant dense<0.000000e+00> : vector<16xf32>
    %109 = vector.multi_reduction <add>, %108, %cst_29 [1] : vector<16x16xf32> to vector<16xf32>
    %110 = vector.shape_cast %109 : vector<16xf32> to vector<16x1xf32>
    %111 = tpu.reciprocal %110 {approx = true} : vector<16x1xf32> -> vector<16x1xf32>
    %112 = vector.broadcast %111 : vector<16x1xf32> to vector<16x16xf32>
    %113 = arith.mulf %108, %112 : vector<16x16xf32>
    %114 = vector.extract_strided_slice %25 {offsets = [0, 16], sizes = [16, 16], strides = [1, 1]} : vector<16x32xf32> to vector<16x16xf32>
    %cst_30 = arith.constant dense<0.000000e+00> : vector<16x16xf32>
    %115 = tpu.matmul %113, %114, %cst_30 {dimension_numbers = #tpu.dot_dimension_numbers<[1], [0], [0], [1], [0, 0, 1, 1], [], []>} : vector<16x16xf32>, vector<16x16xf32>, vector<16x16xf32> -> vector<16x16xf32>
    %116 = tpu.concatenate %67, %83, %99, %115 in 1 : vector<16x16xf32>, vector<16x16xf32>, vector<16x16xf32>, vector<16x16xf32> -> vector<16x64xf32>
    %cst_31 = arith.constant dense<0.000000e+00> : vector<16x64xf32>
    %117 = tpu.matmul %116, %3, %cst_31 {dimension_numbers = #tpu.dot_dimension_numbers<[1], [0], [0], [1], [0, 0, 1, 1], [], []>} : vector<16x64xf32>, vector<64x64xf32>, vector<16x64xf32> -> vector<16x64xf32>
    %118 = arith.addf %0, %117 : vector<16x64xf32>
    %119 = arith.mulf %118, %118 : vector<16x64xf32>
    %cst_32 = arith.constant dense<0.000000e+00> : vector<16xf32>
    %120 = vector.multi_reduction <add>, %119, %cst_32 [1] : vector<16x64xf32> to vector<16xf32>
    %121 = vector.shape_cast %120 : vector<16xf32> to vector<16x1xf32>
    %cst_33 = arith.constant 6.400000e+01 : f32
    %122 = vector.broadcast %cst_33 : f32 to vector<16x1xf32>
    %123 = arith.divf %121, %122 : vector<16x1xf32>
    %cst_34 = arith.constant 9.99999997E-7 : f32
    %124 = vector.broadcast %cst_34 : f32 to vector<16x1xf32>
    %125 = arith.addf %123, %124 : vector<16x1xf32>
    %126 = math.rsqrt %125 : vector<16x1xf32>
    %127 = vector.broadcast %126 : vector<16x1xf32> to vector<16x64xf32>
    %128 = arith.mulf %118, %127 : vector<16x64xf32>
    %cst_35 = arith.constant dense<0.000000e+00> : vector<16x512xf32>
    %129 = tpu.matmul %128, %2, %cst_35 {dimension_numbers = #tpu.dot_dimension_numbers<[1], [0], [0], [1], [0, 0, 1, 1], [], []>} : vector<16x64xf32>, vector<64x512xf32>, vector<16x512xf32> -> vector<16x512xf32>
    %130 = vector.extract_strided_slice %129 {offsets = [0, 0], sizes = [16, 256], strides = [1, 1]} : vector<16x512xf32> to vector<16x256xf32>
    %131 = vector.extract_strided_slice %129 {offsets = [0, 256], sizes = [16, 256], strides = [1, 1]} : vector<16x512xf32> to vector<16x256xf32>
    %132 = arith.negf %131 : vector<16x256xf32>
    %133 = math.exp %132 : vector<16x256xf32>
    %cst_36 = arith.constant 1.000000e+00 : f32
    %134 = vector.broadcast %cst_36 : f32 to vector<16x256xf32>
    %135 = arith.addf %134, %133 : vector<16x256xf32>
    %136 = arith.divf %134, %135 : vector<16x256xf32>
    %137 = arith.mulf %131, %136 : vector<16x256xf32>
    %138 = arith.mulf %130, %137 : vector<16x256xf32>
    %cst_37 = arith.constant dense<0.000000e+00> : vector<16x64xf32>
    %139 = tpu.matmul %138, %4, %cst_37 {dimension_numbers = #tpu.dot_dimension_numbers<[1], [0], [0], [1], [0, 0, 1, 1], [], []>} : vector<16x256xf32>, vector<256x64xf32>, vector<16x64xf32> -> vector<16x64xf32>
    %140 = arith.addf %118, %139 : vector<16x64xf32>
    %c0_38 = arith.constant 0 : index
    %c0_39 = arith.constant 0 : index
    %141 = vector.load %arg4[%c0_38, %c0_39] : memref<16x64xf32, #tpu.memory_space<vmem>>, vector<16x64xf32>
    tpu.vector_store %arg4[%c0_38, %c0_39], %140 {strides = array<i32>} : memref<16x64xf32, #tpu.memory_space<vmem>>, vector<16x64xf32>,
    return
  }
}

</mosaic_0001>

<llo_original>
// kernel: tpu_custom_call.1
$region0: #{tpu_custom_call.1}
  #allocation0 [shape = 'u32[]', space=smem, size = 0x4, offset = 0x4, fixed_abs, tag = 'smem constant byte address 0x4 - core index']
  #allocation1 [shape = 'u32[72,128]{1,0:T(1,128)}', space=vmem, size = 0x9000, scoped, tag = 'internal scratch']
  %s0 = inlined_call_operand.vmem [shape: f32[16,64], index: 0, kind: input, shape index: {}]
  %s1 = inlined_call_operand.vmem [shape: f32[64,640], index: 1, kind: input, shape index: {}]
  %s2 = inlined_call_operand.vmem [shape: f32[320,64], index: 2, kind: input, shape index: {}]
  %s3 = inlined_call_operand.vmem [shape: f32[16,80], index: 3, kind: input, shape index: {}]
  %s4 = inlined_call_operand.hbm [shape: f32[16,64], index: 4, kind: output, shape index: {}]
  %s5 = sld [smem:[#allocation0]]
  $region26: #{tpu_custom_call.1} parent=0
    _
  %s7 = ssub.s32 1, %s5
  %s8 = scalar_select 0, %s7, %s5
  $region1: #{tpu_custom_call.1} parent=0
    #allocation2 [shape = 'u8[8192]{0}', space=vmem, size = 0x2000, scoped, tag = 'output window, operand 0, single buffered']
    #allocation3 [shape = 's32[1]{0}', space=sflag, size = 0x4, scoped, tag = 'scoped memory for tpu_custom_call.1']
    %9 = vsyncpa [#allocation3], 0
    // Predicated region
    $region2: #{tpu_custom_call.1} parent=1 // pred_check
      _
    $region3: #{tpu_custom_call.1} parent=1 // pred_check_branch
      %11 = sbr.rel (0) target = $region5
    $region4: #{tpu_custom_call.1} parent=1 // pred_region
      _
    $region5: #{tpu_custom_call.1} parent=1 // pred_fallthru
      _
    // Predicated region
    $region6: #{tpu_custom_call.1} parent=1 // pred_check
      _
    $region7: #{tpu_custom_call.1} parent=1 // pred_check_branch
      %13 = sbr.rel (0) target = $region9
    $region8: #{tpu_custom_call.1} parent=1 // pred_region
      _
    $region9: #{tpu_custom_call.1} parent=1 // pred_fallthru
      _
    // Predicated region
    $region10: #{tpu_custom_call.1} parent=1 // pred_check
      _
    $region11: #{tpu_custom_call.1} parent=1 // pred_check_branch
      %15 = sbr.rel (0) target = $region13
    $region12: #{tpu_custom_call.1} parent=1 // pred_region
      _
    $region13: #{tpu_custom_call.1} parent=1 // pred_fallthru
      _
    // Predicated region
    $region14: #{tpu_custom_call.1} parent=1 // pred_check
      _
    $region15: #{tpu_custom_call.1} parent=1 // pred_check_branch
      %17 = sbr.rel (0) target = $region17
    $region16: #{tpu_custom_call.1} parent=1 // pred_region
      _
    $region17: #{tpu_custom_call.1} parent=1 // pred_fallthru
      _
    %v18 = vld [vmem:[%s0] sm:$0xff]
    %v19 = vld [vmem:[%s0 + $0x8] sm:$0xff]
    %v20 = vld [vmem:[%s1] sm:$0xff]
    %v21 = vld [vmem:[%s1 + $0x28] sm:$0xff]
    %v22 = vld [vmem:[%s1 + $0x50] sm:$0xff]
    %v23 = vld [vmem:[%s1 + $0x78] sm:$0xff]
    %v24 = vld [vmem:[%s1 + $0xa0] sm:$0xff]
    %v25 = vld [vmem:[%s1 + $0xc8] sm:$0xff]
    %v26 = vld [vmem:[%s1 + $0xf0] sm:$0xff]
    %v27 = vld [vmem:[%s1 + $0x118] sm:$0xff]
    %v28 = vld [vmem:[%s1 + $0x8] sm:$0xff]
    %v29 = vld [vmem:[%s1 + $0x10] sm:$0xff]
    %v30 = vld [vmem:[%s1 + $0x18] sm:$0xff]
    %v31 = vld [vmem:[%s1 + $0x20] sm:$0xff]
    %v32 = vld [vmem:[%s1 + $0x30] sm:$0xff]
    %v33 = vld [vmem:[%s1 + $0x38] sm:$0xff]
    %v34 = vld [vmem:[%s1 + $0x40] sm:$0xff]
    %v35 = vld [vmem:[%s1 + $0x48] sm:$0xff]
    %v36 = vld [vmem:[%s1 + $0x58] sm:$0xff]
    %v37 = vld [vmem:[%s1 + $0x60] sm:$0xff]
    %v38 = vld [vmem:[%s1 + $0x68] sm:$0xff]
    %v39 = vld [vmem:[%s1 + $0x70] sm:$0xff]
    %v40 = vld [vmem:[%s1 + $0x80] sm:$0xff]
    %v41 = vld [vmem:[%s1 + $0x88] sm:$0xff]
    %v42 = vld [vmem:[%s1 + $0x90] sm:$0xff]
    %v43 = vld [vmem:[%s1 + $0x98] sm:$0xff]
    %v44 = vld [vmem:[%s1 + $0xa8] sm:$0xff]
    %v45 = vld [vmem:[%s1 + $0xb0] sm:$0xff]
    %v46 = vld [vmem:[%s1 + $0xb8] sm:$0xff]
    %v47 = vld [vmem:[%s1 + $0xc0] sm:$0xff]
    %v48 = vld [vmem:[%s1 + $0xd0] sm:$0xff]
    %v49 = vld [vmem:[%s1 + $0xd8] sm:$0xff]
    %v50 = vld [vmem:[%s1 + $0xe0] sm:$0xff]
    %v51 = vld [vmem:[%s1 + $0xe8] sm:$0xff]
    %v52 = vld [vmem:[%s1 + $0xf8] sm:$0xff]
    %v53 = vld [vmem:[%s1 + $0x100] sm:$0xff]
    %v54 = vld [vmem:[%s1 + $0x108] sm:$0xff]
    %v55 = vld [vmem:[%s1 + $0x110] sm:$0xff]
    %v56 = vld [vmem:[%s1 + $0x120] sm:$0xff]
    %v57 = vld [vmem:[%s1 + $0x128] sm:$0xff]
    %v58 = vld [vmem:[%s1 + $0x130] sm:$0xff]
    %v59 = vld [vmem:[%s1 + $0x138] sm:$0xff]
    %v60 = vld [vmem:[%s2] sm:$0xff]
    %v61 = vld [vmem:[%s2 + $0x8] sm:$0xff]
    %v62 = vld [vmem:[%s2 + $0x10] sm:$0xff]
    %v63 = vld [vmem:[%s2 + $0x18] sm:$0xff]
    %v64 = vld [vmem:[%s2 + $0x20] sm:$0xff]
    %v65 = vld [vmem:[%s2 + $0x28] sm:$0xff]
    %v66 = vld [vmem:[%s2 + $0x30] sm:$0xff]
    %v67 = vld [vmem:[%s2 + $0x38] sm:$0xff]
    %v68 = vld [vmem:[%s2 + $0x40] sm:$0xff]
    %v69 = vld [vmem:[%s2 + $0x48] sm:$0xff]
    %v70 = vld [vmem:[%s2 + $0x50] sm:$0xff]
    %v71 = vld [vmem:[%s2 + $0x58] sm:$0xff]
    %v72 = vld [vmem:[%s2 + $0x60] sm:$0xff]
    %v73 = vld [vmem:[%s2 + $0x68] sm:$0xff]
    %v74 = vld [vmem:[%s2 + $0x70] sm:$0xff]
    %v75 = vld [vmem:[%s2 + $0x78] sm:$0xff]
    %v76 = vld [vmem:[%s2 + $0x80] sm:$0xff]
    %v77 = vld [vmem:[%s2 + $0x88] sm:$0xff]
    %v78 = vld [vmem:[%s2 + $0x90] sm:$0xff]
    %v79 = vld [vmem:[%s2 + $0x98] sm:$0xff]
    %v80 = vld [vmem:[%s2 + $0xa0] sm:$0xff]
    %v81 = vld [vmem:[%s2 + $0xa8] sm:$0xff]
    %v82 = vld [vmem:[%s2 + $0xb0] sm:$0xff]
    %v83 = vld [vmem:[%s2 + $0xb8] sm:$0xff]
    %v84 = vld [vmem:[%s2 + $0xc0] sm:$0xff]
    %v85 = vld [vmem:[%s2 + $0xc8] sm:$0xff]
    %v86 = vld [vmem:[%s2 + $0xd0] sm:$0xff]
    %v87 = vld [vmem:[%s2 + $0xd8] sm:$0xff]
    %v88 = vld [vmem:[%s2 + $0xe0] sm:$0xff]
    %v89 = vld [vmem:[%s2 + $0xe8] sm:$0xff]
    %v90 = vld [vmem:[%s2 + $0xf0] sm:$0xff]
    %v91 = vld [vmem:[%s2 + $0xf8] sm:$0xff]
    %v92 = vld [vmem:[%s2 + $0x100] sm:$0xff]
    %v93 = vld [vmem:[%s2 + $0x108] sm:$0xff]
    %v94 = vld [vmem:[%s2 + $0x110] sm:$0xff]
    %v95 = vld [vmem:[%s2 + $0x118] sm:$0xff]
    %v96 = vld [vmem:[%s2 + $0x120] sm:$0xff]
    %v97 = vld [vmem:[%s2 + $0x128] sm:$0xff]
    %v98 = vld [vmem:[%s2 + $0x130] sm:$0xff]
    %v99 = vld [vmem:[%s2 + $0x138] sm:$0xff]
    %v100 = vld [vmem:[%s3] sm:$0xff]
    %v101 = vld [vmem:[%s3 + $0x8] sm:$0xff]
    %v102 = vmul.f32 %v18, %v18
    %v103 = vmul.f32 %v19, %v19
    %vm104 = vcmask 523264
    %v105 = vsel %vm104, %v102, 0.0
    %106 = vadd.xlane.f32.xlu0 %v105
    %v107 = vpop.xlane.xlu0 %106
    %v108 = vsel %vm104, %v103, 0.0
    %109 = vadd.xlane.f32.xlu0 %v108
    %v110 = vpop.xlane.xlu0 %109
    %v111 = vrcp.pop 64.0
    %v112 = vmul.f32 64.0, %v111
    %v113 = vsub.f32 1.0, %v112
    %v114 = vmul.f32 %v111, %v113
    %v115 = vadd.f32 %v111, %v114
    %vm116 = vweird.f32 %v111
    %v117 = vsel %vm116, %v111, %v115
    %v118 = vmul.f32 %v107, %v117
    %v119 = vmul.f32 %v110, %v117
    %v120 = vadd.f32 %v118, 1e-06
    %v121 = vadd.f32 %v119, 1e-06
    %v122 = vrsqrt.pop %v120
    %v123 = vmul.f32 %v122, %v120
    %v124 = vmul.f32 %v123, %v122
    %v125 = vmul.f32 0.5, %v124
    %v126 = vsub.f32 1.5, %v125
    %v127 = vmul.f32 %v122, %v126
    %vm128 = vweird.f32 %v120
    %vm129 = vweird.f32 %v122
    %vm130 = vmor %vm128, %vm129
    %v131 = vsel %vm130, %v122, %v127
    %v132 = vrsqrt.pop %v121
    %v133 = vmul.f32 %v132, %v121
    %v134 = vmul.f32 %v133, %v132
    %v135 = vmul.f32 0.5, %v134
    %v136 = vsub.f32 1.5, %v135
    %v137 = vmul.f32 %v132, %v136
    %vm138 = vweird.f32 %v121
    %vm139 = vweird.f32 %v132
    %vm140 = vmor %vm138, %vm139
    %v141 = vsel %vm140, %v132, %v137
    %v142 = vmul.f32 %v18, %v131
    %v143 = vmul.f32 %v19, %v141
    %v145 = vsel %vm104, %v142, 0
    %v148 = vsel %vm104, %v143, 0
    %150 = vmatpush.msra.mxu0 0.0
    %151 = vmatpush.msra.mxu0 0.0
    %152 = vmatpush.msra.mxu0 0.0
    %153 = vmatpush.msra.mxu0 0.0
    %154 = vmatpush.msra.mxu0 0.0
    %155 = vmatpush.msra.mxu0 0.0
    %156 = vmatpush.msra.mxu0 0.0
    %157 = vmatpush.msra.mxu0 0.0
    %158 = vmatpush.msra.mxu0 %v27
    %159 = vmatpush.msra.mxu0 %v26
    %160 = vmatpush.msra.mxu0 %v25
    %161 = vmatpush.msra.mxu0 %v24
    %162 = vmatpush.msra.mxu0 %v23
    %163 = vmatpush.msra.mxu0 %v22
    %164 = vmatpush.msra.mxu0 %v21
    %165 = vmatpush.msra.mxu0 %v20
    %166 = vmatmul.f32.gmra.mxu0 %v145
    %v167 = vpop.f32.mrf.mxu0
    %v168 = vadd.f32 0.0, %v167
    %169 = vmatmul.f32.gmra.mxu0 %v148
    %v170 = vpop.f32.mrf.mxu0
    %v171 = vadd.f32 0.0, %v170
    %172 = vdwg.mxu0
    %v173 = vmul.f32 %v168, %v100
    %v174 = vmul.f32 %v171, %v101
    %177 = vrot.lane.b32.xlu0 %v173, 96
    %v178 = vpop.permute.xlu0 %177
    %179 = vrot.lane.b32.xlu0 %v174, 96
    %v180 = vpop.permute.xlu0 %179
    %v183 = vsub.f32 %v173, %v178
    %v184 = vsub.f32 %v174, %v180
    %187 = vrot.lane.b32.xlu0 %v100, 96
    %v188 = vpop.permute.xlu0 %187
    %189 = vrot.lane.b32.xlu0 %v101, 96
    %v190 = vpop.permute.xlu0 %189
    %v193 = vmul.f32 %v168, %v188
    %v194 = vmul.f32 %v171, %v190
    %195 = vrot.lane.b32.xlu0 %v100, 32
    %v196 = vpop.permute.xlu0 %195
    %197 = vrot.lane.b32.xlu0 %v101, 32
    %v198 = vpop.permute.xlu0 %197
    %v201 = vmul.f32 %v168, %v196
    %v202 = vmul.f32 %v171, %v198
    %205 = vrot.lane.b32.xlu0 %v201, 96
    %v206 = vpop.permute.xlu0 %205
    %207 = vrot.lane.b32.xlu0 %v202, 96
    %v208 = vpop.permute.xlu0 %207
    %v211 = vadd.f32 %v193, %v206
    %v212 = vadd.f32 %v194, %v208
    %213 = vrot.lane.b32.xlu0 %v100, 64
    %v214 = vpop.permute.xlu0 %213
    %215 = vrot.lane.b32.xlu0 %v101, 64
    %v216 = vpop.permute.xlu0 %215
    %v219 = vmul.f32 %v168, %v214
    %v220 = vmul.f32 %v171, %v216
    %221 = vrot.lane.b32.xlu0 %v100, 48
    %v222 = vpop.permute.xlu0 %221
    %223 = vrot.lane.b32.xlu0 %v101, 48
    %v224 = vpop.permute.xlu0 %223
    %v227 = vmul.f32 %v168, %v222
    %v228 = vmul.f32 %v171, %v224
    %231 = vrot.lane.b32.xlu0 %v227, 112
    %v232 = vpop.permute.xlu0 %231
    %233 = vrot.lane.b32.xlu0 %v228, 112
    %v234 = vpop.permute.xlu0 %233
    %v237 = vsub.f32 %v219, %v232
    %v238 = vsub.f32 %v220, %v234
    %239 = vrot.lane.b32.xlu0 %v100, 80
    %v240 = vpop.permute.xlu0 %239
    %241 = vrot.lane.b32.xlu0 %v101, 80
    %v242 = vpop.permute.xlu0 %241
    %v245 = vmul.f32 %v168, %v240
    %v246 = vmul.f32 %v171, %v242
    %249 = vrot.lane.b32.xlu0 %v245, 112
    %v250 = vpop.permute.xlu0 %249
    %251 = vrot.lane.b32.xlu0 %v246, 112
    %v252 = vpop.permute.xlu0 %251
    %v255 = vadd.f32 %v201, %v250
    %v256 = vadd.f32 %v202, %v252
    %259 = vrot.lane.b32.xlu0 %v211, 8
    %v260 = vpop.permute.xlu0 %259
    %261 = vrot.lane.b32.xlu0 %v212, 8
    %v262 = vpop.permute.xlu0 %261
    %267 = vrot.lane.b32.xlu0 %v183, 8
    %v268 = vpop.permute.xlu0 %267
    %269 = vrot.lane.b32.xlu0 %v184, 8
    %v270 = vpop.permute.xlu0 %269
    %273 = vrot.lane.b32.xlu0 %v211, 16
    %v274 = vpop.permute.xlu0 %273
    %275 = vrot.lane.b32.xlu0 %v212, 16
    %v276 = vpop.permute.xlu0 %275
    %279 = vrot.lane.b32.xlu0 %v183, 16
    %v280 = vpop.permute.xlu0 %279
    %281 = vrot.lane.b32.xlu0 %v184, 16
    %v282 = vpop.permute.xlu0 %281
    %285 = vrot.lane.b32.xlu0 %v211, 24
    %v286 = vpop.permute.xlu0 %285
    %287 = vrot.lane.b32.xlu0 %v212, 24
    %v288 = vpop.permute.xlu0 %287
    %291 = vrot.lane.b32.xlu0 %v183, 24
    %v292 = vpop.permute.xlu0 %291
    %293 = vrot.lane.b32.xlu0 %v184, 24
    %v294 = vpop.permute.xlu0 %293
    %297 = vrot.lane.b32.xlu0 %v211, 32
    %v298 = vpop.permute.xlu0 %297
    %299 = vrot.lane.b32.xlu0 %v212, 32
    %v300 = vpop.permute.xlu0 %299
    %vm303 = vcmask 64512
    %v304 = vsel %vm303, %v183, %v260
    %v305 = vsel %vm303, %v184, %v262
    %vm306 = vcmask 130048
    %v307 = vsel %vm306, %v304, %v268
    %v308 = vsel %vm306, %v305, %v270
    %vm309 = vcmask 195584
    %v310 = vsel %vm309, %v307, %v274
    %v311 = vsel %vm309, %v308, %v276
    %vm312 = vcmask 261120
    %v313 = vsel %vm312, %v310, %v280
    %v314 = vsel %vm312, %v311, %v282
    %vm315 = vcmask 326656
    %v316 = vsel %vm315, %v313, %v286
    %v317 = vsel %vm315, %v314, %v288
    %vm318 = vcmask 392192
    %v319 = vsel %vm318, %v316, %v292
    %v320 = vsel %vm318, %v317, %v294
    %vm321 = vcmask 457728
    %v322 = vsel %vm321, %v319, %v298
    %v323 = vsel %vm321, %v320, %v300
    %326 = vrot.lane.b32.xlu0 %v237, 64
    %v327 = vpop.permute.xlu0 %326
    %328 = vrot.lane.b32.xlu0 %v238, 64
    %v329 = vpop.permute.xlu0 %328
    %334 = vrot.lane.b32.xlu0 %v255, 72
    %v335 = vpop.permute.xlu0 %334
    %336 = vrot.lane.b32.xlu0 %v256, 72
    %v337 = vpop.permute.xlu0 %336
    %340 = vrot.lane.b32.xlu0 %v237, 72
    %v341 = vpop.permute.xlu0 %340
    %342 = vrot.lane.b32.xlu0 %v238, 72
    %v343 = vpop.permute.xlu0 %342
    %346 = vrot.lane.b32.xlu0 %v255, 80
    %v347 = vpop.permute.xlu0 %346
    %348 = vrot.lane.b32.xlu0 %v256, 80
    %v349 = vpop.permute.xlu0 %348
    %v352 = vsel %vm303, %v327, %v335
    %v353 = vsel %vm303, %v329, %v337
    %v354 = vsel %vm306, %v352, %v341
    %v355 = vsel %vm306, %v353, %v343
    %v356 = vsel %vm309, %v354, %v347
    %v357 = vsel %vm309, %v355, %v349
    %v359 = vsel %vm306, %v322, 0
    %v362 = vsel %vm306, %v323, 0
    %v365 = vsel %vm306, %v356, 0
    %v368 = vsel %vm306, %v357, 0
    %370 = vmatpush.xpose.msra.mxu0 0.0
    %371 = vmatpush.xpose.msra.mxu0 0.0
    %372 = vmatpush.xpose.msra.mxu0 0.0
    %373 = vmatpush.xpose.msra.mxu0 0.0
    %374 = vmatpush.xpose.msra.mxu0 0.0
    %375 = vmatpush.xpose.msra.mxu0 0.0
    %376 = vmatpush.xpose.msra.mxu0 0.0
    %377 = vmatpush.xpose.msra.mxu0 0.0
    %378 = vmatpush.xpose.msra.mxu0 0.0
    %379 = vmatpush.xpose.msra.mxu0 0.0
    %380 = vmatpush.xpose.msra.mxu0 0.0
    %381 = vmatpush.xpose.msra.mxu0 0.0
    %382 = vmatpush.xpose.msra.mxu0 0.0
    %383 = vmatpush.xpose.msra.mxu0 0.0
    %384 = vmatpush.xpose.msra.mxu0 %v368
    %385 = vmatpush.xpose.msra.mxu0 %v365
    %386 = vmatmul.f32.gmra.mxu0 %v359
    %v387 = vpop.f32.mrf.mxu0
    %v388 = vadd.f32 %v214, %v387
    %389 = vmatmul.f32.gmra.mxu0 %v362
    %v390 = vpop.f32.mrf.mxu0
    %v391 = vadd.f32 %v216, %v390
    %392 = vdwg.mxu0
    %v393 = vsel %vm306, %v388, -inf
    %394 = vmax.xlane.f32.xlu0 %v393
    %v395 = vpop.xlane.xlu0 %394
    %v396 = vsel %vm306, %v391, -inf
    %397 = vmax.xlane.f32.xlu0 %v396
    %v398 = vpop.xlane.xlu0 %397
    %v399 = vsub.f32 %v388, %v395
    %v400 = vsub.f32 %v391, %v398
    %v401 = vmul.f32 %v399, 1.442695
    %v402 = vpow.pop %v401
    %v403 = vmul.f32 %v400, 1.442695
    %v404 = vpow.pop %v403
    %v405 = vsel %vm306, %v402, 0.0
    %406 = vadd.xlane.f32.xlu0 %v405
    %v407 = vpop.xlane.xlu0 %406
    %v408 = vsel %vm306, %v404, 0.0
    %409 = vadd.xlane.f32.xlu0 %v408
    %v410 = vpop.xlane.xlu0 %409
    %v411 = vrcp.pop %v407
    %v412 = vrcp.pop %v410
    %v413 = vmul.f32 %v402, %v411
    %v414 = vmul.f32 %v404, %v412
    %417 = vrot.lane.b32.xlu0 %v168, 32
    %v418 = vpop.permute.xlu0 %417
    %419 = vrot.lane.b32.xlu0 %v171, 32
    %v420 = vpop.permute.xlu0 %419
    %v424 = vsel %vm306, %v413, 0
    %v427 = vsel %vm306, %v414, 0
    %429 = vmatpush.msra.mxu0 0.0
    %430 = vmatpush.msra.mxu0 0.0
    %431 = vmatpush.msra.mxu0 0.0
    %432 = vmatpush.msra.mxu0 0.0
    %433 = vmatpush.msra.mxu0 0.0
    %434 = vmatpush.msra.mxu0 0.0
    %435 = vmatpush.msra.mxu0 0.0
    %436 = vmatpush.msra.mxu0 0.0
    %437 = vmatpush.msra.mxu0 0.0
    %438 = vmatpush.msra.mxu0 0.0
    %439 = vmatpush.msra.mxu0 0.0
    %440 = vmatpush.msra.mxu0 0.0
    %441 = vmatpush.msra.mxu0 0.0
    %442 = vmatpush.msra.mxu0 0.0
    %443 = vmatpush.msra.mxu0 %v420
    %444 = vmatpush.msra.mxu0 %v418
    %445 = vmatmul.f32.gmra.mxu0 %v424
    %v446 = vpop.f32.mrf.mxu0
    %v447 = vadd.f32 0.0, %v446
    %448 = vmatmul.f32.gmra.mxu0 %v427
    %v449 = vpop.f32.mrf.mxu0
    %v450 = vadd.f32 0.0, %v449
    %451 = vdwg.mxu0
    %452 = vrot.lane.b32.xlu0 %v322, 112
    %v453 = vpop.permute.xlu0 %452
    %454 = vrot.lane.b32.xlu0 %v323, 112
    %v455 = vpop.permute.xlu0 %454
    %v456 = vsel %vm306, %v453, 0
    %v458 = vsel %vm306, %v455, 0
    %460 = vmatpush.xpose.msra.mxu0 0.0
    %461 = vmatpush.xpose.msra.mxu0 0.0
    %462 = vmatpush.xpose.msra.mxu0 0.0
    %463 = vmatpush.xpose.msra.mxu0 0.0
    %464 = vmatpush.xpose.msra.mxu0 0.0
    %465 = vmatpush.xpose.msra.mxu0 0.0
    %466 = vmatpush.xpose.msra.mxu0 0.0
    %467 = vmatpush.xpose.msra.mxu0 0.0
    %468 = vmatpush.xpose.msra.mxu0 0.0
    %469 = vmatpush.xpose.msra.mxu0 0.0
    %470 = vmatpush.xpose.msra.mxu0 0.0
    %471 = vmatpush.xpose.msra.mxu0 0.0
    %472 = vmatpush.xpose.msra.mxu0 0.0
    %473 = vmatpush.xpose.msra.mxu0 0.0
    %474 = vmatpush.xpose.msra.mxu0 %v368
    %475 = vmatpush.xpose.msra.mxu0 %v365
    %476 = vmatmul.f32.gmra.mxu0 %v456
    %v477 = vpop.f32.mrf.mxu0
    %v478 = vadd.f32 %v214, %v477
    %479 = vmatmul.f32.gmra.mxu0 %v458
    %v480 = vpop.f32.mrf.mxu0
    %v481 = vadd.f32 %v216, %v480
    %482 = vdwg.mxu0
    %v483 = vsel %vm306, %v478, -inf
    %484 = vmax.xlane.f32.xlu0 %v483
    %v485 = vpop.xlane.xlu0 %484
    %v486 = vsel %vm306, %v481, -inf
    %487 = vmax.xlane.f32.xlu0 %v486
    %v488 = vpop.xlane.xlu0 %487
    %v489 = vsub.f32 %v478, %v485
    %v490 = vsub.f32 %v481, %v488
    %v491 = vmul.f32 %v489, 1.442695
    %v492 = vpow.pop %v491
    %v493 = vmul.f32 %v490, 1.442695
    %v494 = vpow.pop %v493
    %v495 = vsel %vm306, %v492, 0.0
    %496 = vadd.xlane.f32.xlu0 %v495
    %v497 = vpop.xlane.xlu0 %496
    %v498 = vsel %vm306, %v494, 0.0
    %499 = vadd.xlane.f32.xlu0 %v498
    %v500 = vpop.xlane.xlu0 %499
    %v501 = vrcp.pop %v497
    %v502 = vrcp.pop %v500
    %v503 = vmul.f32 %v492, %v501
    %v504 = vmul.f32 %v494, %v502
    %v506 = vsel %vm306, %v503, 0
    %v509 = vsel %vm306, %v504, 0
    %511 = vmatpush.msra.mxu0 0.0
    %512 = vmatpush.msra.mxu0 0.0
    %513 = vmatpush.msra.mxu0 0.0
    %514 = vmatpush.msra.mxu0 0.0
    %515 = vmatpush.msra.mxu0 0.0
    %516 = vmatpush.msra.mxu0 0.0
    %517 = vmatpush.msra.mxu0 0.0
    %518 = vmatpush.msra.mxu0 0.0
    %519 = vmatpush.msra.mxu0 0.0
    %520 = vmatpush.msra.mxu0 0.0
    %521 = vmatpush.msra.mxu0 0.0
    %522 = vmatpush.msra.mxu0 0.0
    %523 = vmatpush.msra.mxu0 0.0
    %524 = vmatpush.msra.mxu0 0.0
    %525 = vmatpush.msra.mxu0 %v420
    %526 = vmatpush.msra.mxu0 %v418
    %527 = vmatmul.f32.gmra.mxu0 %v506
    %v528 = vpop.f32.mrf.mxu0
    %v529 = vadd.f32 0.0, %v528
    %530 = vmatmul.f32.gmra.mxu0 %v509
    %v531 = vpop.f32.mrf.mxu0
    %v532 = vadd.f32 0.0, %v531
    %533 = vdwg.mxu0
    %534 = vrot.lane.b32.xlu0 %v322, 96
    %v535 = vpop.permute.xlu0 %534
    %536 = vrot.lane.b32.xlu0 %v323, 96
    %v537 = vpop.permute.xlu0 %536
    %538 = vrot.lane.b32.xlu0 %v356, 112
    %v539 = vpop.permute.xlu0 %538
    %540 = vrot.lane.b32.xlu0 %v357, 112
    %v541 = vpop.permute.xlu0 %540
    %v542 = vsel %vm306, %v535, 0
    %v544 = vsel %vm306, %v537, 0
    %v546 = vsel %vm306, %v539, 0
    %v548 = vsel %vm306, %v541, 0
    %550 = vmatpush.xpose.msra.mxu0 0.0
    %551 = vmatpush.xpose.msra.mxu0 0.0
    %552 = vmatpush.xpose.msra.mxu0 0.0
    %553 = vmatpush.xpose.msra.mxu0 0.0
    %554 = vmatpush.xpose.msra.mxu0 0.0
    %555 = vmatpush.xpose.msra.mxu0 0.0
    %556 = vmatpush.xpose.msra.mxu0 0.0
    %557 = vmatpush.xpose.msra.mxu0 0.0
    %558 = vmatpush.xpose.msra.mxu0 0.0
    %559 = vmatpush.xpose.msra.mxu0 0.0
    %560 = vmatpush.xpose.msra.mxu0 0.0
    %561 = vmatpush.xpose.msra.mxu0 0.0
    %562 = vmatpush.xpose.msra.mxu0 0.0
    %563 = vmatpush.xpose.msra.mxu0 0.0
    %564 = vmatpush.xpose.msra.mxu0 %v548
    %565 = vmatpush.xpose.msra.mxu0 %v546
    %566 = vmatmul.f32.gmra.mxu0 %v542
    %v567 = vpop.f32.mrf.mxu0
    %v568 = vadd.f32 %v214, %v567
    %569 = vmatmul.f32.gmra.mxu0 %v544
    %v570 = vpop.f32.mrf.mxu0
    %v571 = vadd.f32 %v216, %v570
    %572 = vdwg.mxu0
    %v573 = vsel %vm306, %v568, -inf
    %574 = vmax.xlane.f32.xlu0 %v573
    %v575 = vpop.xlane.xlu0 %574
    %v576 = vsel %vm306, %v571, -inf
    %577 = vmax.xlane.f32.xlu0 %v576
    %v578 = vpop.xlane.xlu0 %577
    %v579 = vsub.f32 %v568, %v575
    %v580 = vsub.f32 %v571, %v578
    %v581 = vmul.f32 %v579, 1.442695
    %v582 = vpow.pop %v581
    %v583 = vmul.f32 %v580, 1.442695
    %v584 = vpow.pop %v583
    %v585 = vsel %vm306, %v582, 0.0
    %586 = vadd.xlane.f32.xlu0 %v585
    %v587 = vpop.xlane.xlu0 %586
    %v588 = vsel %vm306, %v584, 0.0
    %589 = vadd.xlane.f32.xlu0 %v588
    %v590 = vpop.xlane.xlu0 %589
    %v591 = vrcp.pop %v587
    %v592 = vrcp.pop %v590
    %v593 = vmul.f32 %v582, %v591
    %v594 = vmul.f32 %v584, %v592
    %595 = vrot.lane.b32.xlu0 %v168, 16
    %v596 = vpop.permute.xlu0 %595
    %597 = vrot.lane.b32.xlu0 %v171, 16
    %v598 = vpop.permute.xlu0 %597
    %v602 = vsel %vm306, %v593, 0
    %v605 = vsel %vm306, %v594, 0
    %607 = vmatpush.msra.mxu0 0.0
    %608 = vmatpush.msra.mxu0 0.0
    %609 = vmatpush.msra.mxu0 0.0
    %610 = vmatpush.msra.mxu0 0.0
    %611 = vmatpush.msra.mxu0 0.0
    %612 = vmatpush.msra.mxu0 0.0
    %613 = vmatpush.msra.mxu0 0.0
    %614 = vmatpush.msra.mxu0 0.0
    %615 = vmatpush.msra.mxu0 0.0
    %616 = vmatpush.msra.mxu0 0.0
    %617 = vmatpush.msra.mxu0 0.0
    %618 = vmatpush.msra.mxu0 0.0
    %619 = vmatpush.msra.mxu0 0.0
    %620 = vmatpush.msra.mxu0 0.0
    %621 = vmatpush.msra.mxu0 %v598
    %622 = vmatpush.msra.mxu0 %v596
    %623 = vmatmul.f32.gmra.mxu0 %v602
    %v624 = vpop.f32.mrf.mxu0
    %v625 = vadd.f32 0.0, %v624
    %626 = vmatmul.f32.gmra.mxu0 %v605
    %v627 = vpop.f32.mrf.mxu0
    %v628 = vadd.f32 0.0, %v627
    %629 = vdwg.mxu0
    %630 = vrot.lane.b32.xlu0 %v322, 80
    %v631 = vpop.permute.xlu0 %630
    %632 = vrot.lane.b32.xlu0 %v323, 80
    %v633 = vpop.permute.xlu0 %632
    %v634 = vsel %vm306, %v631, 0
    %v636 = vsel %vm306, %v633, 0
    %638 = vmatpush.xpose.msra.mxu0 0.0
    %639 = vmatpush.xpose.msra.mxu0 0.0
    %640 = vmatpush.xpose.msra.mxu0 0.0
    %641 = vmatpush.xpose.msra.mxu0 0.0
    %642 = vmatpush.xpose.msra.mxu0 0.0
    %643 = vmatpush.xpose.msra.mxu0 0.0
    %644 = vmatpush.xpose.msra.mxu0 0.0
    %645 = vmatpush.xpose.msra.mxu0 0.0
    %646 = vmatpush.xpose.msra.mxu0 0.0
    %647 = vmatpush.xpose.msra.mxu0 0.0
    %648 = vmatpush.xpose.msra.mxu0 0.0
    %649 = vmatpush.xpose.msra.mxu0 0.0
    %650 = vmatpush.xpose.msra.mxu0 0.0
    %651 = vmatpush.xpose.msra.mxu0 0.0
    %652 = vmatpush.xpose.msra.mxu0 %v548
    %653 = vmatpush.xpose.msra.mxu0 %v546
    %654 = vmatmul.f32.gmra.mxu0 %v634
    %v655 = vpop.f32.mrf.mxu0
    %v656 = vadd.f32 %v214, %v655
    %657 = vmatmul.f32.gmra.mxu0 %v636
    %v658 = vpop.f32.mrf.mxu0
    %v659 = vadd.f32 %v216, %v658
    %660 = vdwg.mxu0
    %v661 = vsel %vm306, %v656, -inf
    %662 = vmax.xlane.f32.xlu0 %v661
    %v663 = vpop.xlane.xlu0 %662
    %v664 = vsel %vm306, %v659, -inf
    %665 = vmax.xlane.f32.xlu0 %v664
    %v666 = vpop.xlane.xlu0 %665
    %v667 = vsub.f32 %v656, %v663
    %v668 = vsub.f32 %v659, %v666
    %v669 = vmul.f32 %v667, 1.442695
    %v670 = vpow.pop %v669
    %v671 = vmul.f32 %v668, 1.442695
    %v672 = vpow.pop %v671
    %v673 = vsel %vm306, %v670, 0.0
    %674 = vadd.xlane.f32.xlu0 %v673
    %v675 = vpop.xlane.xlu0 %674
    %v676 = vsel %vm306, %v672, 0.0
    %677 = vadd.xlane.f32.xlu0 %v676
    %v678 = vpop.xlane.xlu0 %677
    %v679 = vrcp.pop %v675
    %v680 = vrcp.pop %v678
    %v681 = vmul.f32 %v670, %v679
    %v682 = vmul.f32 %v672, %v680
    %v684 = vsel %vm306, %v681, 0
    %v687 = vsel %vm306, %v682, 0
    %689 = vmatpush.msra.mxu0 0.0
    %690 = vmatpush.msra.mxu0 0.0
    %691 = vmatpush.msra.mxu0 0.0
    %692 = vmatpush.msra.mxu0 0.0
    %693 = vmatpush.msra.mxu0 0.0
    %694 = vmatpush.msra.mxu0 0.0
    %695 = vmatpush.msra.mxu0 0.0
    %696 = vmatpush.msra.mxu0 0.0
    %697 = vmatpush.msra.mxu0 0.0
    %698 = vmatpush.msra.mxu0 0.0
    %699 = vmatpush.msra.mxu0 0.0
    %700 = vmatpush.msra.mxu0 0.0
    %701 = vmatpush.msra.mxu0 0.0
    %702 = vmatpush.msra.mxu0 0.0
    %703 = vmatpush.msra.mxu0 %v598
    %704 = vmatpush.msra.mxu0 %v596
    %705 = vmatmul.f32.gmra.mxu0 %v684
    %v706 = vpop.f32.mrf.mxu0
    %v707 = vadd.f32 0.0, %v706
    %708 = vmatmul.f32.gmra.mxu0 %v687
    %v709 = vpop.f32.mrf.mxu0
    %v710 = vadd.f32 0.0, %v709
    %711 = vdwg.mxu0
    %714 = vrot.lane.b32.xlu0 %v529, 16
    %v715 = vpop.permute.xlu0 %714
    %716 = vrot.lane.b32.xlu0 %v532, 16
    %v717 = vpop.permute.xlu0 %716
    %722 = vrot.lane.b32.xlu0 %v625, 32
    %v723 = vpop.permute.xlu0 %722
    %724 = vrot.lane.b32.xlu0 %v628, 32
    %v725 = vpop.permute.xlu0 %724
    %730 = vrot.lane.b32.xlu0 %v707, 48
    %v731 = vpop.permute.xlu0 %730
    %732 = vrot.lane.b32.xlu0 %v710, 48
    %v733 = vpop.permute.xlu0 %732
    %v736 = vsel %vm306, %v447, %v715
    %v737 = vsel %vm306, %v450, %v717
    %v738 = vsel %vm312, %v736, %v723
    %v739 = vsel %vm312, %v737, %v725
    %v740 = vsel %vm318, %v738, %v731
    %v741 = vsel %vm318, %v739, %v733
    %v743 = vsel %vm104, %v740, 0
    %v746 = vsel %vm104, %v741, 0
    %748 = vmatpush.msra.mxu0 0.0
    %749 = vmatpush.msra.mxu0 0.0
    %750 = vmatpush.msra.mxu0 0.0
    %751 = vmatpush.msra.mxu0 0.0
    %752 = vmatpush.msra.mxu0 0.0
    %753 = vmatpush.msra.mxu0 0.0
    %754 = vmatpush.msra.mxu0 0.0
    %755 = vmatpush.msra.mxu0 0.0
    %756 = vmatpush.msra.mxu0 %v67
    %757 = vmatpush.msra.mxu0 %v66
    %758 = vmatpush.msra.mxu0 %v65
    %759 = vmatpush.msra.mxu0 %v64
    %760 = vmatpush.msra.mxu0 %v63
    %761 = vmatpush.msra.mxu0 %v62
    %762 = vmatpush.msra.mxu0 %v61
    %763 = vmatpush.msra.mxu0 %v60
    %764 = vmatmul.f32.gmra.mxu0 %v743
    %v765 = vpop.f32.mrf.mxu0
    %v766 = vadd.f32 0.0, %v765
    %767 = vmatmul.f32.gmra.mxu0 %v746
    %v768 = vpop.f32.mrf.mxu0
    %v769 = vadd.f32 0.0, %v768
    %770 = vdwg.mxu0
    %v771 = vadd.f32 %v18, %v766
    %v772 = vadd.f32 %v19, %v769
    %v773 = vmul.f32 %v771, %v771
    %v774 = vmul.f32 %v772, %v772
    %v775 = vsel %vm104, %v773, 0.0
    %776 = vadd.xlane.f32.xlu0 %v775
    %v777 = vpop.xlane.xlu0 %776
    %v778 = vsel %vm104, %v774, 0.0
    %779 = vadd.xlane.f32.xlu0 %v778
    %v780 = vpop.xlane.xlu0 %779
    %v781 = vmul.f32 %v777, %v117
    %v782 = vmul.f32 %v780, %v117
    %v783 = vadd.f32 %v781, 1e-06
    %v784 = vadd.f32 %v782, 1e-06
    %v785 = vrsqrt.pop %v783
    %v786 = vmul.f32 %v785, %v783
    %v787 = vmul.f32 %v786, %v785
    %v788 = vmul.f32 0.5, %v787
    %v789 = vsub.f32 1.5, %v788
    %v790 = vmul.f32 %v785, %v789
    %vm791 = vweird.f32 %v783
    %vm792 = vweird.f32 %v785
    %vm793 = vmor %vm791, %vm792
    %v794 = vsel %vm793, %v785, %v790
    %v795 = vrsqrt.pop %v784
    %v796 = vmul.f32 %v795, %v784
    %v797 = vmul.f32 %v796, %v795
    %v798 = vmul.f32 0.5, %v797
    %v799 = vsub.f32 1.5, %v798
    %v800 = vmul.f32 %v795, %v799
    %vm801 = vweird.f32 %v784
    %vm802 = vweird.f32 %v795
    %vm803 = vmor %vm801, %vm802
    %v804 = vsel %vm803, %v795, %v800
    %v805 = vmul.f32 %v771, %v794
    %v806 = vmul.f32 %v772, %v804
    %v808 = vsel %vm104, %v805, 0
    %v811 = vsel %vm104, %v806, 0
    %813 = vmatpush.msra.mxu0 0.0
    %814 = vmatpush.msra.mxu0 0.0
    %815 = vmatpush.msra.mxu0 0.0
    %816 = vmatpush.msra.mxu0 0.0
    %817 = vmatpush.msra.mxu0 0.0
    %818 = vmatpush.msra.mxu0 0.0
    %819 = vmatpush.msra.mxu0 0.0
    %820 = vmatpush.msra.mxu0 0.0
    %821 = vmatpush.msra.mxu0 %v56
    %822 = vmatpush.msra.mxu0 %v52
    %823 = vmatpush.msra.mxu0 %v48
    %824 = vmatpush.msra.mxu0 %v44
    %825 = vmatpush.msra.mxu0 %v40
    %826 = vmatpush.msra.mxu0 %v36
    %827 = vmatpush.msra.mxu0 %v32
    %828 = vmatpush.msra.mxu0 %v28
    %829 = vmatmul.f32.gmra.mxu0 %v808
    %v830 = vpop.f32.mrf.mxu0
    %v831 = vadd.f32 0.0, %v830
    %832 = vmatmul.f32.gmra.mxu0 %v811
    %v833 = vpop.f32.mrf.mxu0
    %v834 = vadd.f32 0.0, %v833
    %835 = vdwg.mxu0
    %836 = vmatpush.msra.mxu0 0.0
    %837 = vmatpush.msra.mxu0 0.0
    %838 = vmatpush.msra.mxu0 0.0
    %839 = vmatpush.msra.mxu0 0.0
    %840 = vmatpush.msra.mxu0 0.0
    %841 = vmatpush.msra.mxu0 0.0
    %842 = vmatpush.msra.mxu0 0.0
    %843 = vmatpush.msra.mxu0 0.0
    %844 = vmatpush.msra.mxu0 %v57
    %845 = vmatpush.msra.mxu0 %v53
    %846 = vmatpush.msra.mxu0 %v49
    %847 = vmatpush.msra.mxu0 %v45
    %848 = vmatpush.msra.mxu0 %v41
    %849 = vmatpush.msra.mxu0 %v37
    %850 = vmatpush.msra.mxu0 %v33
    %851 = vmatpush.msra.mxu0 %v29
    %852 = vmatmul.f32.gmra.mxu0 %v808
    %v853 = vpop.f32.mrf.mxu0
    %v854 = vadd.f32 0.0, %v853
    %855 = vmatmul.f32.gmra.mxu0 %v811
    %v856 = vpop.f32.mrf.mxu0
    %v857 = vadd.f32 0.0, %v856
    %858 = vdwg.mxu0
    %859 = vmatpush.msra.mxu0 0.0
    %860 = vmatpush.msra.mxu0 0.0
    %861 = vmatpush.msra.mxu0 0.0
    %862 = vmatpush.msra.mxu0 0.0
    %863 = vmatpush.msra.mxu0 0.0
    %864 = vmatpush.msra.mxu0 0.0
    %865 = vmatpush.msra.mxu0 0.0
    %866 = vmatpush.msra.mxu0 0.0
    %867 = vmatpush.msra.mxu0 %v58
    %868 = vmatpush.msra.mxu0 %v54
    %869 = vmatpush.msra.mxu0 %v50
    %870 = vmatpush.msra.mxu0 %v46
    %871 = vmatpush.msra.mxu0 %v42
    %872 = vmatpush.msra.mxu0 %v38
    %873 = vmatpush.msra.mxu0 %v34
    %874 = vmatpush.msra.mxu0 %v30
    %875 = vmatmul.f32.gmra.mxu0 %v808
    %v876 = vpop.f32.mrf.mxu0
    %v877 = vadd.f32 0.0, %v876
    %878 = vmatmul.f32.gmra.mxu0 %v811
    %v879 = vpop.f32.mrf.mxu0
    %v880 = vadd.f32 0.0, %v879
    %881 = vdwg.mxu0
    %882 = vmatpush.msra.mxu0 0.0
    %883 = vmatpush.msra.mxu0 0.0
    %884 = vmatpush.msra.mxu0 0.0
    %885 = vmatpush.msra.mxu0 0.0
    %886 = vmatpush.msra.mxu0 0.0
    %887 = vmatpush.msra.mxu0 0.0
    %888 = vmatpush.msra.mxu0 0.0
    %889 = vmatpush.msra.mxu0 0.0
    %890 = vmatpush.msra.mxu0 %v59
    %891 = vmatpush.msra.mxu0 %v55
    %892 = vmatpush.msra.mxu0 %v51
    %893 = vmatpush.msra.mxu0 %v47
    %894 = vmatpush.msra.mxu0 %v43
    %895 = vmatpush.msra.mxu0 %v39
    %896 = vmatpush.msra.mxu0 %v35
    %897 = vmatpush.msra.mxu0 %v31
    %898 = vmatmul.f32.gmra.mxu0 %v808
    %v899 = vpop.f32.mrf.mxu0
    %v900 = vadd.f32 0.0, %v899
    %901 = vmatmul.f32.gmra.mxu0 %v811
    %v902 = vpop.f32.mrf.mxu0
    %v903 = vadd.f32 0.0, %v902
    %904 = vdwg.mxu0
    %v905 = vxor.u32 %v877, 2147483648
    %v906 = vxor.u32 %v900, 2147483648
    %v907 = vxor.u32 %v880, 2147483648
    %v908 = vxor.u32 %v903, 2147483648
    %v909 = vmul.f32 %v905, 1.442695
    %v910 = vpow.pop %v909
    %v911 = vmul.f32 %v906, 1.442695
    %v912 = vpow.pop %v911
    %v913 = vmul.f32 %v907, 1.442695
    %v914 = vpow.pop %v913
    %v915 = vmul.f32 %v908, 1.442695
    %v916 = vpow.pop %v915
    %v917 = vadd.f32 %v910, 1.0
    %v918 = vadd.f32 %v912, 1.0
    %v919 = vadd.f32 %v914, 1.0
    %v920 = vadd.f32 %v916, 1.0
    %v921 = vrcp.pop %v917
    %v922 = vmul.f32 %v917, %v921
    %v923 = vsub.f32 1.0, %v922
    %v924 = vmul.f32 %v921, %v923
    %v925 = vadd.f32 %v921, %v924
    %vm926 = vweird.f32 %v917
    %vm927 = vweird.f32 %v921
    %vm928 = vmor %vm926, %vm927
    %v929 = vsel %vm928, %v921, %v925
    %v930 = vand.u32 2147483647, %v917
    %vm931 = vcmp.eq.f32.partialorder %v930, 8.507059e+37
    %v932 = vand.u32 %v917, 2147483648
    %v933 = vor.u32 1.1754944e-38, %v932
    %v934 = vsel %vm931, %v933, %v929
    %v935 = vmul.f32 1.0, %v934
    %v936 = vrcp.pop %v918
    %v937 = vmul.f32 %v918, %v936
    %v938 = vsub.f32 1.0, %v937
    %v939 = vmul.f32 %v936, %v938
    %v940 = vadd.f32 %v936, %v939
    %vm941 = vweird.f32 %v918
    %vm942 = vweird.f32 %v936
    %vm943 = vmor %vm941, %vm942
    %v944 = vsel %vm943, %v936, %v940
    %v945 = vand.u32 2147483647, %v918
    %vm946 = vcmp.eq.f32.partialorder %v945, 8.507059e+37
    %v947 = vand.u32 %v918, 2147483648
    %v948 = vor.u32 1.1754944e-38, %v947
    %v949 = vsel %vm946, %v948, %v944
    %v950 = vmul.f32 1.0, %v949
    %v951 = vrcp.pop %v919
    %v952 = vmul.f32 %v919, %v951
    %v953 = vsub.f32 1.0, %v952
    %v954 = vmul.f32 %v951, %v953
    %v955 = vadd.f32 %v951, %v954
    %vm956 = vweird.f32 %v919
    %vm957 = vweird.f32 %v951
    %vm958 = vmor %vm956, %vm957
    %v959 = vsel %vm958, %v951, %v955
    %v960 = vand.u32 2147483647, %v919
    %vm961 = vcmp.eq.f32.partialorder %v960, 8.507059e+37
    %v962 = vand.u32 %v919, 2147483648
    %v963 = vor.u32 1.1754944e-38, %v962
    %v964 = vsel %vm961, %v963, %v959
    %v965 = vmul.f32 1.0, %v964
    %v966 = vrcp.pop %v920
    %v967 = vmul.f32 %v920, %v966
    %v968 = vsub.f32 1.0, %v967
    %v969 = vmul.f32 %v966, %v968
    %v970 = vadd.f32 %v966, %v969
    %vm971 = vweird.f32 %v920
    %vm972 = vweird.f32 %v966
    %vm973 = vmor %vm971, %vm972
    %v974 = vsel %vm973, %v966, %v970
    %v975 = vand.u32 2147483647, %v920
    %vm976 = vcmp.eq.f32.partialorder %v975, 8.507059e+37
    %v977 = vand.u32 %v920, 2147483648
    %v978 = vor.u32 1.1754944e-38, %v977
    %v979 = vsel %vm976, %v978, %v974
    %v980 = vmul.f32 1.0, %v979
    %v981 = vmul.f32 %v877, %v935
    %v982 = vmul.f32 %v900, %v950
    %v983 = vmul.f32 %v880, %v965
    %v984 = vmul.f32 %v903, %v980
    %v985 = vmul.f32 %v831, %v981
    %v986 = vmul.f32 %v854, %v982
    %v987 = vmul.f32 %v834, %v983
    %v988 = vmul.f32 %v857, %v984
    %989 = vmatpush.msra.mxu0 %v83
    %990 = vmatpush.msra.mxu0 %v82
    %991 = vmatpush.msra.mxu0 %v81
    %992 = vmatpush.msra.mxu0 %v80
    %993 = vmatpush.msra.mxu0 %v79
    %994 = vmatpush.msra.mxu0 %v78
    %995 = vmatpush.msra.mxu0 %v77
    %996 = vmatpush.msra.mxu0 %v76
    %997 = vmatpush.msra.mxu0 %v75
    %998 = vmatpush.msra.mxu0 %v74
    %999 = vmatpush.msra.mxu0 %v73
    %1000 = vmatpush.msra.mxu0 %v72
    %1001 = vmatpush.msra.mxu0 %v71
    %1002 = vmatpush.msra.mxu0 %v70
    %1003 = vmatpush.msra.mxu0 %v69
    %1004 = vmatpush.msra.mxu0 %v68
    %1005 = vmatmul.f32.gmra.mxu0 %v985
    %v1006 = vpop.f32.mrf.mxu0
    %v1007 = vadd.f32 0.0, %v1006
    %1008 = vmatmul.f32.gmra.mxu0 %v987
    %v1009 = vpop.f32.mrf.mxu0
    %v1010 = vadd.f32 0.0, %v1009
    %1011 = vdwg.mxu0
    %1012 = vmatpush.msra.mxu0 %v99
    %1013 = vmatpush.msra.mxu0 %v98
    %1014 = vmatpush.msra.mxu0 %v97
    %1015 = vmatpush.msra.mxu0 %v96
    %1016 = vmatpush.msra.mxu0 %v95
    %1017 = vmatpush.msra.mxu0 %v94
    %1018 = vmatpush.msra.mxu0 %v93
    %1019 = vmatpush.msra.mxu0 %v92
    %1020 = vmatpush.msra.mxu0 %v91
    %1021 = vmatpush.msra.mxu0 %v90
    %1022 = vmatpush.msra.mxu0 %v89
    %1023 = vmatpush.msra.mxu0 %v88
    %1024 = vmatpush.msra.mxu0 %v87
    %1025 = vmatpush.msra.mxu0 %v86
    %1026 = vmatpush.msra.mxu0 %v85
    %1027 = vmatpush.msra.mxu0 %v84
    %1028 = vmatmul.f32.gmra.mxu0 %v986
    %v1029 = vpop.f32.mrf.mxu0
    %v1030 = vadd.f32 %v1007, %v1029
    %1031 = vmatmul.f32.gmra.mxu0 %v988
    %v1032 = vpop.f32.mrf.mxu0
    %v1033 = vadd.f32 %v1010, %v1032
    %1034 = vdwg.mxu0
    %v1035 = vadd.f32 %v771, %v1030
    %v1036 = vadd.f32 %v772, %v1033
    %1037 = vst.msk [vmem:[#allocation2] sm:$0xff] %vm104, %v1035
    %1038 = vst.msk [vmem:[#allocation2 + $0x8] sm:$0xff] %vm104, %v1036
    // Predicated region
    $region18: #{tpu_custom_call.1} parent=1 // pred_check
      _
    $region19: #{tpu_custom_call.1} parent=1 // pred_check_branch
      %1040 = sbr.rel (0) target = $region21
    $region20: #{tpu_custom_call.1} parent=1 // pred_region
      %1042 = vsyncadd [#allocation3], 0
      %s1043 = sshll.u32 [#allocation2], 4
      %s1044 = int_to_ptr.vmem [resolvable:$true] %s1043
      %s1045 = sshll.u32 %s4, 4
      %s1046 = int_to_ptr.hbm [resolvable:$true] %s1045
      %1051 = dma.vmem_to_hbm [thread:$0]  %s1044, 256, %s1046, [#allocation3], 128, 128, 8
    $region21: #{tpu_custom_call.1} parent=1 // pred_fallthru
      _
    // Predicated region
    $region22: #{tpu_custom_call.1} parent=1 // pred_check
      _
    $region23: #{tpu_custom_call.1} parent=1 // pred_check_branch
      %1053 = sbr.rel (0) target = $region25
    $region24: #{tpu_custom_call.1} parent=1 // pred_region
      %1055 = dma.done [#allocation3], 256
    $region25: #{tpu_custom_call.1} parent=1 // pred_fallthru
      _
    %1056 = vsyncpa [#allocation3], 1

</llo_original>
